<compile_context>
chip_gen: v6e
topology: v6e:2x2x1
jax: 0.10.0
libtpu: 0.0.40
codegen_flags: <defaults>
</compile_context>

<pallas_src>
import functools
import math

import jax
import jax.numpy as jnp
from jax.experimental import pallas as pl
from jax.experimental.pallas import tpu as pltpu


_VMEM_LIMIT_BYTES = 48 * 1024 * 1024       # < v7x 64 MiB physical VMEM per TC
_BLOCK_BYTES_TARGET = 3 * 1024 * 1024      # ~85%+ of HBM roofline per tile


def _round_up(n, m):
    return (n + m - 1) // m * m


def _sublane_multiple(dtype):
    # Sub-32-bit dtypes pack along sublanes: (8,128) f32, (16,128) bf16,
    # (32,128) int8/fp8 native tiles.
    return max(8, 32 // max(1, jnp.dtype(dtype).itemsize))


def _pick_tile_rows(m, f, dtype, max_rows=None):
    """Rows per tile: dtype-aware sublane multiple, ~3 MiB per block, and at
    least ~4 grid steps so the parallel axis can split across v7x's 2 TCs and
    BlockSpec double-buffering actually overlaps DMA with compute."""
    sub = _sublane_multiple(dtype)
    bytes_per_row = max(1, f * jnp.dtype(dtype).itemsize)
    rows = max(sub, _BLOCK_BYTES_TARGET // bytes_per_row)
    rows = min(rows, max(sub, pl.cdiv(m, 4)))
    if max_rows is not None:
        rows = min(rows, max(sub, int(max_rows)))
    rows = max(sub, (rows // sub) * sub)
    return min(rows, _round_up(m, sub))


def _row_spec(tm, f):
    return pl.BlockSpec((tm, f), lambda i: (i, 0))


def _const_spec(f):
    return pl.BlockSpec((1, f), lambda i: (0, 0))


def _compiler_params():
    return pltpu.CompilerParams(
        dimension_semantics=("parallel",),
        vmem_limit_bytes=_VMEM_LIMIT_BYTES,
    )


# ---------------------------------------------------------------------------
# Kernel 1: LayerNorm (PyTorch-style: unbiased std, (std + eps) denominator)
# ---------------------------------------------------------------------------
def _layernorm_kernel(x_ref, a_ref, b_ref, o_ref, *, eps, feat):
    x = x_ref[...].astype(jnp.float32)                        # (TM, F)
    mean = jnp.mean(x, axis=-1, keepdims=True)                # (TM, 1)
    xc = x - mean
    # torch.Tensor.std() default is unbiased: divide by (F - 1).
    var = jnp.sum(xc * xc, axis=-1, keepdims=True) * (1.0 / (feat - 1))
    inv = 1.0 / (jnp.sqrt(var) + eps)                         # (TM, 1) column
    a = a_ref[...]                                            # (1, F) f32, resident
    b = b_ref[...]
    o_ref[...] = (a * (xc * inv) + b).astype(o_ref.dtype)


def layer_norm(x, a_2, b_2, *, eps=1e-6, block_rows=None):
    orig_shape = x.shape
    f = int(orig_shape[-1])
    m = int(math.prod(orig_shape[:-1]))
    x2 = x.reshape(m, f)                                      # lane-dense slab
    # Keep the affine params in f32 (they are used in f32 inside the kernel;
    # avoids quantizing them when x is bf16).
    a2 = jnp.asarray(a_2, dtype=jnp.float32).reshape(1, f)
    b2 = jnp.asarray(b_2, dtype=jnp.float32).reshape(1, f)

    tm = _pick_tile_rows(m, f, x.dtype, block_rows)
    out = pl.pallas_call(
        functools.partial(_layernorm_kernel, eps=float(eps), feat=f),
        out_shape=jax.ShapeDtypeStruct((m, f), x.dtype),
        grid=(pl.cdiv(m, tm),),                               # ragged tail OK
        in_specs=[_row_spec(tm, f), _const_spec(f), _const_spec(f)],
        out_specs=_row_spec(tm, f),
        compiler_params=_compiler_params(),
    )(x2, a2, b2)
    return out.reshape(orig_shape)


# ---------------------------------------------------------------------------
# Kernel 2 (training only): inverted dropout fused with the residual add.
# ---------------------------------------------------------------------------
def _residual_dropout_add_kernel(x_ref, y_ref, u_ref, o_ref, *, rate):
    keep = u_ref[...] >= jnp.float32(rate)                    # uniform in [0,1)
    scale = 1.0 / (1.0 - rate) if rate < 1.0 else 0.0
    # Select/scale in the input dtype (halves vreg footprint for bf16).
    y = jnp.where(keep, y_ref[...] * scale, 0.0)
    o_ref[...] = x_ref[...] + y


def residual_dropout_add(x, y, *, dropout_rate, rng_seed=0, block_rows=None):
    assert x.shape == y.shape
    orig_shape = x.shape
    f = int(orig_shape[-1])
    m = int(math.prod(orig_shape[:-1]))
    x2 = x.reshape(m, f)
    y2 = y.reshape(m, f)
    # Mask depends only on the seed (not tile size) -> reproducible training.
    # TODO(synk): on guaranteed real-TPU targets, generate the mask on-chip
    # with pltpu.prng_random_bits to avoid streaming this uniform slab.
    u2 = jax.random.uniform(jax.random.PRNGKey(rng_seed), (m, f),
                            dtype=jnp.float32)

    tm = _pick_tile_rows(m, f, x.dtype, block_rows)
    out = pl.pallas_call(
        functools.partial(_residual_dropout_add_kernel,
                          rate=float(dropout_rate)),
        out_shape=jax.ShapeDtypeStruct((m, f), x.dtype),
        grid=(pl.cdiv(m, tm),),
        in_specs=[_row_spec(tm, f), _row_spec(tm, f), _row_spec(tm, f)],
        out_specs=_row_spec(tm, f),
        compiler_params=_compiler_params(),
    )(x2, y2, u2)
    return out.reshape(orig_shape)


# ---------------------------------------------------------------------------
# SublayerConnection.forward
# ---------------------------------------------------------------------------
def sublayer_connection(x, a_2, b_2, sublayer, *, eps=1e-6, dropout_rate=0.0,
                        training=False, rng_seed=0, block_rows=None):
    """x + dropout(sublayer(LayerNorm(x))), matching the PyTorch module."""
    normed = layer_norm(x, a_2, b_2, eps=eps, block_rows=block_rows)
    # `sublayer` is an arbitrary user-supplied module; it runs as plain JAX
    # between the two stages and cannot be fused into the kernels.
    y = sublayer(normed)
    if training:
        return residual_dropout_add(x, y, dropout_rate=dropout_rate,
                                    rng_seed=rng_seed, block_rows=block_rows)
    # Eval mode: dropout is identity.  A plain JAX add lets XLA fuse the
    # residual into the sublayer's final-op epilogue, saving one HBM slab
    # writeback + re-read vs. a dedicated Pallas kernel.
    return x + y


if __name__ == "__main__":
    key = jax.random.PRNGKey(0)
    k_x, k_a, k_b, k_w = jax.random.split(key, 4)

    B, T, F = 2, 16, 32          # batch, seq, hidden size
    eps = 1e-6

    x = jax.random.normal(k_x, (B, T, F), dtype=jnp.float32)
    # PyTorch init is ones/zeros; perturb so the affine path is really tested.
    a_2 = 1.0 + 0.1 * jax.random.normal(k_a, (F,), dtype=jnp.float32)
    b_2 = 0.1 * jax.random.normal(k_b, (F,), dtype=jnp.float32)

    # A representative sublayer (tiny feed-forward) as a JAX callable.
    w = jax.random.normal(k_w, (F, F), dtype=jnp.float32) / jnp.sqrt(F)
    sublayer = lambda t: jnp.tanh(t @ w)

    # ---- eval-mode forward (dropout is identity).  block_rows=8 -> 4-step
    # grid even at demo shapes, exercising the tiled / pipelined path.
    out = sublayer_connection(x, a_2, b_2, sublayer, eps=eps,
                              dropout_rate=0.1, training=False, block_rows=8)
    out = jax.block_until_ready(out)

    # Pure-JAX reference of the PyTorch forward (eval mode).
    mean = jnp.mean(x, axis=-1, keepdims=True)
    var = jnp.sum((x - mean) ** 2, axis=-1, keepdims=True) / (F - 1)  # unbiased
    std = jnp.sqrt(var)
    normed_ref = a_2 * (x - mean) / (std + eps) + b_2
    y_ref = sublayer(normed_ref)
    ref = x + y_ref

    assert out.shape == x.shape
    assert jnp.allclose(out, ref, atol=1e-5, rtol=1e-5), \
        float(jnp.max(jnp.abs(out - ref)))

    # ---- training path, rate=0: every element kept, scale=1 -> equals eval.
    out_tr0 = sublayer_connection(x, a_2, b_2, sublayer, eps=eps,
                                  dropout_rate=0.0, training=True,
                                  rng_seed=123, block_rows=8)
    out_tr0 = jax.block_until_ready(out_tr0)
    assert jnp.allclose(out_tr0, out, atol=1e-6, rtol=1e-6)

    # ---- training path, rate=0.5: reference built from the identical
    # seed-determined uniform mask.
    p, seed = 0.5, 7
    out_tr = sublayer_connection(x, a_2, b_2, sublayer, eps=eps,
                                 dropout_rate=p, training=True, rng_seed=seed)
    out_tr = jax.block_until_ready(out_tr)
    u = jax.random.uniform(jax.random.PRNGKey(seed), (B * T, F),
                           dtype=jnp.float32).reshape(B, T, F)
    ref_tr = x + jnp.where(u >= p, y_ref / (1.0 - p), 0.0)
    assert jnp.allclose(out_tr, ref_tr, atol=1e-5, rtol=1e-5), \
        float(jnp.max(jnp.abs(out_tr - ref_tr)))

    print("KERNEL_OK")
</pallas_src>

<mosaic_0001>
module attributes {stable_mosaic.version = 11 : i64} {
  func.func @_layernorm_kernel(%arg0: i32, %arg1: memref<8x32xf32, #tpu.memory_space<vmem>>, %arg2: memref<1x32xf32, #tpu.memory_space<vmem>>, %arg3: memref<1x32xf32, #tpu.memory_space<vmem>>, %arg4: memref<8x32xf32, #tpu.memory_space<vmem>>) attributes {dimension_semantics = [#tpu.dimension_semantics<parallel>], iteration_bounds = array<i64: 4>, scalar_prefetch = 0 : i64, scratch_operands = 0 : i64, tpu.core_type = #tpu.core_type<tc>, window_params = [{transform_indices = @transform_0, window_bounds = array<i64: 8, 32>}, {pipeline_mode = #tpu.pipeline_mode<synchronous>, transform_indices = @transform_1, window_bounds = array<i64: 1, 32>}, {pipeline_mode = #tpu.pipeline_mode<synchronous>, transform_indices = @transform_2, window_bounds = array<i64: 1, 32>}, {transform_indices = @transform_3, window_bounds = array<i64: 8, 32>}]} {
    %c0 = arith.constant 0 : index
    %c0_0 = arith.constant 0 : index
    %0 = vector.load %arg1[%c0, %c0_0] : memref<8x32xf32, #tpu.memory_space<vmem>>, vector<8x32xf32>
    %cst = arith.constant dense<0.000000e+00> : vector<8xf32>
    %1 = vector.multi_reduction <add>, %0, %cst [1] : vector<8x32xf32> to vector<8xf32>
    %2 = vector.shape_cast %1 : vector<8xf32> to vector<8x1xf32>
    %cst_1 = arith.constant 3.200000e+01 : f32
    %3 = vector.broadcast %cst_1 : f32 to vector<8x1xf32>
    %4 = arith.divf %2, %3 : vector<8x1xf32>
    %5 = vector.broadcast %4 : vector<8x1xf32> to vector<8x32xf32>
    %6 = arith.subf %0, %5 : vector<8x32xf32>
    %7 = arith.mulf %6, %6 : vector<8x32xf32>
    %cst_2 = arith.constant dense<0.000000e+00> : vector<8xf32>
    %8 = vector.multi_reduction <add>, %7, %cst_2 [1] : vector<8x32xf32> to vector<8xf32>
    %9 = vector.shape_cast %8 : vector<8xf32> to vector<8x1xf32>
    %cst_3 = arith.constant 0.0322580636 : f32
    %10 = vector.broadcast %cst_3 : f32 to vector<8x1xf32>
    %11 = arith.mulf %9, %10 : vector<8x1xf32>
    %12 = math.sqrt %11 : vector<8x1xf32>
    %cst_4 = arith.constant 9.99999997E-7 : f32
    %13 = vector.broadcast %cst_4 : f32 to vector<8x1xf32>
    %14 = arith.addf %12, %13 : vector<8x1xf32>
    %cst_5 = arith.constant 1.000000e+00 : f32
    %15 = vector.broadcast %cst_5 : f32 to vector<8x1xf32>
    %16 = arith.divf %15, %14 : vector<8x1xf32>
    %c0_6 = arith.constant 0 : index
    %c0_7 = arith.constant 0 : index
    %17 = vector.load %arg2[%c0_6, %c0_7] : memref<1x32xf32, #tpu.memory_space<vmem>>, vector<1x32xf32>
    %c0_8 = arith.constant 0 : index
    %c0_9 = arith.constant 0 : index
    %18 = vector.load %arg3[%c0_8, %c0_9] : memref<1x32xf32, #tpu.memory_space<vmem>>, vector<1x32xf32>
    %19 = vector.broadcast %16 : vector<8x1xf32> to vector<8x32xf32>
    %20 = arith.mulf %6, %19 : vector<8x32xf32>
    %21 = vector.broadcast %17 : vector<1x32xf32> to vector<8x32xf32>
    %22 = arith.mulf %21, %20 : vector<8x32xf32>
    %23 = vector.broadcast %18 : vector<1x32xf32> to vector<8x32xf32>
    %24 = arith.addf %22, %23 : vector<8x32xf32>
    %c0_10 = arith.constant 0 : index
    %c0_11 = arith.constant 0 : index
    %25 = vector.load %arg4[%c0_10, %c0_11] : memref<8x32xf32, #tpu.memory_space<vmem>>, vector<8x32xf32>
    tpu.vector_store %arg4[%c0_10, %c0_11], %24 {strides = array<i32>} : memref<8x32xf32, #tpu.memory_space<vmem>>, vector<8x32xf32>,
    return
  }
  func.func @transform_0(%arg0: i32) -> (i32, i32) {
    %c0_i32 = arith.constant 0 : i32
    %c0_i32_0 = arith.constant 0 : i32
    return %arg0, %c0_i32 : i32, i32
  }
  func.func @transform_1(%arg0: i32) -> (i32, i32) {
    %c0_i32 = arith.constant 0 : i32
    %c0_i32_0 = arith.constant 0 : i32
    %c0_i32_1 = arith.constant 0 : i32
    return %c0_i32, %c0_i32_0 : i32, i32
  }
  func.func @transform_2(%arg0: i32) -> (i32, i32) {
    %c0_i32 = arith.constant 0 : i32
    %c0_i32_0 = arith.constant 0 : i32
    %c0_i32_1 = arith.constant 0 : i32
    return %c0_i32, %c0_i32_0 : i32, i32
  }
  func.func @transform_3(%arg0: i32) -> (i32, i32) {
    %c0_i32 = arith.constant 0 : i32
    %c0_i32_0 = arith.constant 0 : i32
    return %arg0, %c0_i32 : i32, i32
  }
}

</mosaic_0001>

<llo_original>
// kernel: tpu_custom_call.1
$region0: #{tpu_custom_call.1}
  #allocation0 [shape = 'u32[]', space=smem, size = 0x4, offset = 0x4, fixed_abs, tag = 'smem constant byte address 0x4 - core index']
  #allocation1 [shape = 'u32[144,128]{1,0:T(1,128)}', space=vmem, size = 0x12000, scoped, tag = 'internal scratch']
  %s0 = inlined_call_operand.hbm [shape: f32[32,32], index: 0, kind: input, shape index: {}]
  %s1 = inlined_call_operand.vmem [shape: f32[1,32], index: 1, kind: input, shape index: {}]
  %s2 = inlined_call_operand.vmem [shape: f32[1,32], index: 2, kind: input, shape index: {}]
  %s3 = inlined_call_operand.hbm [shape: f32[32,32], index: 3, kind: output, shape index: {}]
  %s4 = sld [smem:[#allocation0]]
  $region49: #{tpu_custom_call.1} parent=0
    _
  %s6 = ssub.s32 1, %s4
  %s7 = scalar_select 0, %s6, %s4
  $region1: #{tpu_custom_call.1} parent=0
    #allocation2 [shape = 'u8[8192]{0}', space=vmem, size = 0x2000, scoped, tag = 'input window, operand 0']
    #allocation3 [shape = 's32[2]{0}', space=sflag, size = 0x8, scoped, tag = 'scoped memory for tpu_custom_call.1']
    #allocation4 [shape = 's32[2]{0}', space=sflag, size = 0x8, scoped, tag = 'scoped memory for tpu_custom_call.1']
    #allocation5 [shape = 'u8[8192]{0}', space=vmem, size = 0x2000, scoped, tag = 'output window, operand 0']
    %8 = vsyncpa [#allocation3], 0
    %s9 = scalar_lea.sflag [#allocation3], 1
    %10 = vsyncpa %s9, 0
    %11 = vsyncpa [#allocation4], 0
    %s12 = scalar_lea.sflag [#allocation4], 1
    %13 = vsyncpa %s12, 0
    loop: start=0, step=1, limit=6
    $region2: #{tpu_custom_call.1} parent=1 // loop_pre_header
      _
    $region3: #{tpu_custom_call.1} parent=1 // loop_header
      %s15 = sphi 0, %s19
      %p16 = scmp.ge.s32.totalorder %s15, 6
      %s25 = sphi 0, %s27
      %s28 = sphi 0, %s25
      %s29 = sphi 0, %s28
      %s45 = sphi 0, %s29
      %s49 = sphi 0, %s49
      %s51 = sphi 0, %s49
      %s52 = sphi 0, %s51
      %s66 = sphi 0, %s52
      %s70 = sphi 0, %s70
      %s72 = sphi 0, %s70
      %s73 = sphi 0, %s72
      %s87 = sphi 0, %s73
      %s93 = sphi 0, %s95
      %s96 = sphi 0, %s93
      %s97 = sphi 0, %s96
      %s113 = sphi 0, %s97
    $region4: #{tpu_custom_call.1} parent=1 // loop_header_branch
      %18 = sbr.rel (%p16) target = $region8
    $region5: #{tpu_custom_call.1} parent=1 // loop_body
      %s20 = ssub.s32 %s15, 1
      %s21 = ssub.s32 %s15, 2
      %s22 = sadd.s32 %s15, 1
      %s23 = ssub.s32 %s15, %s22
      %p24 = scmp.eq.s32.totalorder %s23, 0
      %s26 = sadd.s32 %s25, 1
      %s27 = scalar_select %p24, %s25, %s26
      %p30 = pneg %p24
      %p31 = scmp.eq.s32.totalorder %s15, 3
      %p32 = por %p30, %p31
      %p33 = scmp.ne.s32.totalorder %s25, %s28
      %p34 = scmp.eq.s32.totalorder %s15, 0
      %p35 = por %p33, %p34
      %p36 = scmp.ne.s32.totalorder %s25, %s28
      %p37 = scmp.eq.s32.totalorder %s20, 3
      %p38 = por %p36, %p37
      %p39 = scmp.ne.s32.totalorder %s28, %s29
      %p40 = scmp.eq.s32.totalorder %s20, 0
      %p41 = por %p39, %p40
      %p42 = scmp.ne.s32.totalorder %s28, %s29
      %p43 = scmp.eq.s32.totalorder %s21, 3
      %p44 = por %p42, %p43
      %p46 = scmp.ne.s32.totalorder %s29, %s45
      %p47 = scmp.eq.s32.totalorder %s21, 0
      %p48 = por %p46, %p47
      %s50 = sadd.s32 %s49, 1
      %p53 = scmp.eq.s32.totalorder %s15, 3
      %p54 = scmp.ne.s32.totalorder %s49, %s51
      %p55 = scmp.eq.s32.totalorder %s15, 0
      %p56 = por %p54, %p55
      %p57 = scmp.ne.s32.totalorder %s49, %s51
      %p58 = scmp.eq.s32.totalorder %s20, 3
      %p59 = por %p57, %p58
      %p60 = scmp.ne.s32.totalorder %s51, %s52
      %p61 = scmp.eq.s32.totalorder %s20, 0
      %p62 = por %p60, %p61
      %p63 = scmp.ne.s32.totalorder %s51, %s52
      %p64 = scmp.eq.s32.totalorder %s21, 3
      %p65 = por %p63, %p64
      %p67 = scmp.ne.s32.totalorder %s52, %s66
      %p68 = scmp.eq.s32.totalorder %s21, 0
      %p69 = por %p67, %p68
      %s71 = sadd.s32 %s70, 1
      %p74 = scmp.eq.s32.totalorder %s15, 3
      %p75 = scmp.ne.s32.totalorder %s70, %s72
      %p76 = scmp.eq.s32.totalorder %s15, 0
      %p77 = por %p75, %p76
      %p78 = scmp.ne.s32.totalorder %s70, %s72
      %p79 = scmp.eq.s32.totalorder %s20, 3
      %p80 = por %p78, %p79
      %p81 = scmp.ne.s32.totalorder %s72, %s73
      %p82 = scmp.eq.s32.totalorder %s20, 0
      %p83 = por %p81, %p82
      %p84 = scmp.ne.s32.totalorder %s72, %s73
      %p85 = scmp.eq.s32.totalorder %s21, 3
      %p86 = por %p84, %p85
      %p88 = scmp.ne.s32.totalorder %s73, %s87
      %p89 = scmp.eq.s32.totalorder %s21, 0
      %p90 = por %p88, %p89
      %s91 = ssub.s32 %s15, %s22
      %p92 = scmp.eq.s32.totalorder %s91, 0
      %s94 = sadd.s32 %s93, 1
      %s95 = scalar_select %p92, %s93, %s94
      %p98 = pneg %p92
      %p99 = scmp.eq.s32.totalorder %s15, 3
      %p100 = por %p98, %p99
      %p101 = scmp.ne.s32.totalorder %s93, %s96
      %p102 = scmp.eq.s32.totalorder %s15, 0
      %p103 = por %p101, %p102
      %p104 = scmp.ne.s32.totalorder %s93, %s96
      %p105 = scmp.eq.s32.totalorder %s20, 3
      %p106 = por %p104, %p105
      %p107 = scmp.ne.s32.totalorder %s96, %s97
      %p108 = scmp.eq.s32.totalorder %s20, 0
      %p109 = por %p107, %p108
      %p110 = scmp.ne.s32.totalorder %s96, %s97
      %p111 = scmp.eq.s32.totalorder %s21, 3
      %p112 = por %p110, %p111
      %p114 = scmp.ne.s32.totalorder %s97, %s113
      %p115 = scmp.eq.s32.totalorder %s21, 0
      %p116 = por %p114, %p115
      %p117 = scmp.le.s32.totalorder 1, %s15
      %p118 = scmp.lt.s32.totalorder %s15, 5
      %p119 = pnand %p117, %p118
      %p120 = pneg %p119
      // Predicated region
      $region9: #{tpu_custom_call.1} parent=5 // pred_check
        _
      $region10: #{tpu_custom_call.1} parent=5 // pred_check_branch
        %122 = sbr.rel (%p119) target = $region12
      $region11: #{tpu_custom_call.1} parent=5 // pred_region
        %s123 = ssub.s32 %s15, 1
        // Predicated region
        $region13: #{tpu_custom_call.1} parent=11 // pred_check
          %p124 = pneg %p62
        $region14: #{tpu_custom_call.1} parent=11 // pred_check_branch
          %126 = sbr.rel (%p124) target = $region16
        $region15: #{tpu_custom_call.1} parent=11 // pred_region
          _
        $region16: #{tpu_custom_call.1} parent=11 // pred_fallthru
          _
        // Predicated region
        $region17: #{tpu_custom_call.1} parent=11 // pred_check
          %p127 = pneg %p83
        $region18: #{tpu_custom_call.1} parent=11 // pred_check_branch
          %129 = sbr.rel (%p127) target = $region20
        $region19: #{tpu_custom_call.1} parent=11 // pred_region
          _
        $region20: #{tpu_custom_call.1} parent=11 // pred_fallthru
          _
      $region12: #{tpu_custom_call.1} parent=5 // pred_fallthru
        _
      %p130 = scmp.lt.s32.totalorder %s15, 4
      // Predicated region
      $region21: #{tpu_custom_call.1} parent=5 // pred_check
        %p131 = pneg %p130
      $region22: #{tpu_custom_call.1} parent=5 // pred_check_branch
        %133 = sbr.rel (%p131) target = $region24
      $region23: #{tpu_custom_call.1} parent=5 // pred_region
        // Predicated region
        $region25: #{tpu_custom_call.1} parent=23 // pred_check
          %p134 = pneg %p35
        $region26: #{tpu_custom_call.1} parent=23 // pred_check_branch
          %136 = sbr.rel (%p134) target = $region28
        $region27: #{tpu_custom_call.1} parent=23 // pred_region
          %s137 = sand.u32 %s25, 1
          %s138 = scalar_lea.sflag [#allocation3], %s137
          %s139 = sand.u32 %s25, 1
          %s140 = smul.addr %s139, 8
          %s141 = scalar_lea.vmem [#allocation2], %s140
          %s143 = ssub.s32 128, 128
          %144 = vsyncadd %s138, %s143
          %s145 = smul.addr %s15, 128
          %s146 = scalar_lea.hbm %s0, %s145
          %s148 = sshll.u32 %s141, 4
          %s149 = int_to_ptr.vmem [resolvable:$true] %s148
          %151 = dma.hbm_to_vmem [thread:$0]  %s146, 128, %s149, %s138
        $region28: #{tpu_custom_call.1} parent=23 // pred_fallthru
          _
      $region24: #{tpu_custom_call.1} parent=5 // pred_fallthru
        _
      %p152 = scmp.le.s32.totalorder 1, %s15
      %p153 = scmp.lt.s32.totalorder %s15, 5
      %p154 = pnand %p152, %p153
      %p155 = pneg %p154
      // Predicated region
      $region29: #{tpu_custom_call.1} parent=5 // pred_check
        _
      $region30: #{tpu_custom_call.1} parent=5 // pred_check_branch
        %157 = sbr.rel (%p154) target = $region32
      $region31: #{tpu_custom_call.1} parent=5 // pred_region
        %s158 = ssub.s32 %s15, 1
        %s159 = sand.u32 %s28, 1
        %s160 = scalar_lea.sflag [#allocation3], %s159
        %s161 = sand.u32 %s28, 1
        %s162 = smul.addr %s161, 8
        %s163 = scalar_lea.vmem [#allocation2], %s162
        // Predicated region
        $region33: #{tpu_custom_call.1} parent=31 // pred_check
          %p164 = pneg %p41
        $region34: #{tpu_custom_call.1} parent=31 // pred_check_branch
          %166 = sbr.rel (%p164) target = $region36
        $region35: #{tpu_custom_call.1} parent=31 // pred_region
          %167 = dma.done %s160, 128
        $region36: #{tpu_custom_call.1} parent=31 // pred_fallthru
          _
        %s168 = sand.u32 %s28, 1
        %s169 = scalar_lea.sflag [#allocation3], %s168
        %s170 = sand.u32 %s28, 1
        %s171 = smul.addr %s170, 8
        %s172 = scalar_lea.vmem [#allocation2], %s171
        %p173 = pneg %p41
        %p174 = pneg %p38
        %p175 = pneg %p62
        %p176 = pneg %p59
        %p177 = pneg %p83
        %p178 = pneg %p80
        %p179 = pneg %p109
        %p180 = pneg %p106
        %s181 = sand.u32 %s96, 1
        %s182 = scalar_lea.sflag [#allocation4], %s181
        %s183 = sand.u32 %s96, 1
        %s184 = smul.addr %s183, 8
        %s185 = scalar_lea.vmem [#allocation5], %s184
        %v186 = vld [vmem:[%s163] sm:$0xff]
        %vm187 = vcmask 261120
        %v188 = vsel %vm187, %v186, 0.0
        %189 = vadd.xlane.f32.xlu0 %v188
        %v190 = vpop.xlane.xlu0 %189
        %v191 = vrcp.pop 32.0
        %v192 = vmul.f32 %v190, %v191
        %v193 = vsub.f32 %v186, %v192
        %v194 = vmul.f32 %v193, %v193
        %v195 = vsel %vm187, %v194, 0.0
        %196 = vadd.xlane.f32.xlu0 %v195
        %v197 = vpop.xlane.xlu0 %196
        %v198 = vmul.f32 %v197, 0.032258064
        %v199 = vrsqrt.pop %v198
        %v200 = vmul.f32 %v198, %v199
        %vm201 = vcmp.eq.f32.partialorder %v198, inf
        %v202 = vsel %vm201, %v198, %v200
        %vm203 = vcmp.eq.f32.partialorder %v198, 0.0
        %v204 = vand.u32 %v198, 2147483648
        %v205 = vsel %vm203, %v204, %v202
        %v206 = vadd.f32 %v205, 1e-06
        %v207 = vrcp.pop %v206
        %v208 = vmul.f32 1.0, %v207
        %v209 = vld [vmem:[%s1] sm:$0x1]
        %v210 = vld [vmem:[%s2] sm:$0x1]
        %v211 = vmul.f32 %v193, %v208
        %v213 = vlaneseq
        %v214 = vshrl.u32 %v213, 7
        %v215 = vsub.s32 0, %v214
        %v216 = vrot.slane %v209, %v215
        %v218 = vmul.f32 %v216, %v211
        %v220 = vlaneseq
        %v221 = vshrl.u32 %v220, 7
        %v222 = vsub.s32 0, %v221
        %v223 = vrot.slane %v210, %v222
        %v225 = vadd.f32 %v218, %v223
        %226 = vst.msk [vmem:[%s185] sm:$0xff] %vm187, %v225
        %s227 = sand.u32 %s96, 1
        %s228 = scalar_lea.sflag [#allocation4], %s227
        %s229 = sand.u32 %s96, 1
        %s230 = smul.addr %s229, 8
        %s231 = scalar_lea.vmem [#allocation5], %s230
        // Predicated region
        $region37: #{tpu_custom_call.1} parent=31 // pred_check
          %p232 = pneg %p106
        $region38: #{tpu_custom_call.1} parent=31 // pred_check_branch
          %234 = sbr.rel (%p232) target = $region40
        $region39: #{tpu_custom_call.1} parent=31 // pred_region
          %s236 = ssub.s32 128, 128
          %237 = vsyncadd %s228, %s236
          %s238 = smul.addr %s20, 128
          %s239 = scalar_lea.hbm %s3, %s238
          %s241 = sshll.u32 %s231, 4
          %s242 = int_to_ptr.vmem [resolvable:$true] %s241
          %244 = dma.vmem_to_hbm [thread:$0]  %s242, 128, %s239, %s228
        $region40: #{tpu_custom_call.1} parent=31 // pred_fallthru
          _
      $region32: #{tpu_custom_call.1} parent=5 // pred_fallthru
        _
      %p245 = scmp.le.s32.totalorder 2, %s15
      // Predicated region
      $region41: #{tpu_custom_call.1} parent=5 // pred_check
        %p246 = pneg %p245
      $region42: #{tpu_custom_call.1} parent=5 // pred_check_branch
        %248 = sbr.rel (%p246) target = $region44
      $region43: #{tpu_custom_call.1} parent=5 // pred_region
        %s249 = ssub.s32 %s15, 2
        // Predicated region
        $region45: #{tpu_custom_call.1} parent=43 // pred_check
          %p250 = pneg %p112
        $region46: #{tpu_custom_call.1} parent=43 // pred_check_branch
          %252 = sbr.rel (%p250) target = $region48
        $region47: #{tpu_custom_call.1} parent=43 // pred_region
          %s253 = sand.u32 %s97, 1
          %s254 = scalar_lea.sflag [#allocation4], %s253
          %s255 = sand.u32 %s97, 1
          %s256 = smul.addr %s255, 8
          %s257 = scalar_lea.vmem [#allocation5], %s256
          %258 = dma.done %s254, 128
        $region48: #{tpu_custom_call.1} parent=43 // pred_fallthru
          _
      $region44: #{tpu_custom_call.1} parent=5 // pred_fallthru
        _
    $region6: #{tpu_custom_call.1} parent=1 // loop_footer
      %s19 = sadd.s32 1, %s15
    $region7: #{tpu_custom_call.1} parent=1 // loop_footer_branch
      %14 = sbr.rel target = $region3
    $region8: #{tpu_custom_call.1} parent=1 // loop_exit
      _
    %259 = vsyncpa [#allocation3], 1
    %s260 = scalar_lea.sflag [#allocation3], 1
    %261 = vsyncpa %s260, 1
    %262 = vsyncpa [#allocation4], 1
    %s263 = scalar_lea.sflag [#allocation4], 1
    %264 = vsyncpa %s263, 1

</llo_original>
